<compile_context>
chip_gen: v7x
topology: tpu7x:2x2x1
jax: 0.10.0
libtpu: 0.0.40
codegen_flags: <defaults>
</compile_context>

<pallas_src>
import jax
import jax.numpy as jnp
from jax.experimental import pallas as pl
from jax.experimental.pallas import tpu as pltpu

_LANE = 128


def _round_up(v, m):
    return (v + m - 1) // m * m


def _actor_kernel(x_ref, w1_ref, b1_ref, w2_ref, b2_ref, out_ref):
    """One batch tile, feature-major layout.

      x_ref  : [F, TB] bf16      w1_ref : [N, F] bf16     b1_ref : [N, 1] f32
      w2_ref : [A, N]  bf16      b2_ref : [A, 1] f32      out_ref: [A, TB] f32
    """
    # hT = W1^T @ xT + b1, ReLU.  Single MXU push (bf16 in, f32 acc).
    h = jnp.maximum(
        jnp.dot(w1_ref[...], x_ref[...], preferred_element_type=jnp.float32)
        + b1_ref[...],
        0.0,
    )
    # outT = W2^T @ hT + b2, tanh (EUP), lane-dense f32 store.
    a = jnp.dot(w2_ref[...], h.astype(jnp.bfloat16),
                preferred_element_type=jnp.float32) + b2_ref[...]
    out_ref[...] = jnp.tanh(a)


def actor_forward(xs, params, *, tb_max=2048):
    """xs: list of [B, d_i] f32 arrays (vector states -> Identity preprocess).

    params = (w1t [N, F] bf16, b1 [N, 1] f32, w2t [A, N] bf16, b2 [A, 1] f32),
    weights stored transposed ([out, in]) so the kernel runs feature-major.
    Returns actions [B, A] f32.
    """
    w1t, b1, w2t, b2 = params
    B = xs[0].shape[0]
    F = sum(int(x.shape[1]) for x in xs)
    N, A = w1t.shape[0], w2t.shape[0]
    assert w1t.shape == (N, F) and w2t.shape == (A, N)

    # Batch tile: lane-aligned (tb_max clamped to a multiple of 128), as large
    # as possible, but split into >=2 grid steps when the batch allows so the
    # "parallel" grid axis has work for both v7x TensorCores.
    tb_max = max(_LANE, (int(tb_max) // _LANE) * _LANE)
    b_lanes = _round_up(B, _LANE)
    TB = min(tb_max, b_lanes)
    if b_lanes > _LANE and TB == b_lanes:
        TB = _round_up(-(-b_lanes // 2), _LANE)   # ~half the batch, lane-aligned
    Bp = _round_up(B, TB)
    grid = (Bp // TB,)

    # Wrapper-side layout plumbing, fused into ONE materialization:
    # transpose -> concat (fuses the per-source concat) -> pad batch -> bf16.
    xT = jnp.concatenate([x.T for x in xs], axis=0)            # [F, B]
    xT = jnp.pad(xT, ((0, 0), (0, Bp - B))).astype(jnp.bfloat16)

    in_specs = [
        pl.BlockSpec((F, TB), lambda j: (0, j)),   # xT (pipelined over batch)
        pl.BlockSpec((N, F), lambda j: (0, 0)),    # w1t (VMEM-resident)
        pl.BlockSpec((N, 1), lambda j: (0, 0)),    # b1
        pl.BlockSpec((A, N), lambda j: (0, 0)),    # w2t
        pl.BlockSpec((A, 1), lambda j: (0, 0)),    # b2
    ]

    out_t = pl.pallas_call(
        _actor_kernel,
        out_shape=jax.ShapeDtypeStruct((A, Bp), jnp.float32),
        grid=grid,
        in_specs=in_specs,
        out_specs=pl.BlockSpec((A, TB), lambda j: (0, j)),
        compiler_params=pltpu.CompilerParams(
            dimension_semantics=("parallel",)),
    )(xT, w1t, b1, w2t, b2)

    # Drop batch padding, back to the module's [B, A] layout.  (Padding
    # columns carry garbage through ReLU/tanh by design; they must be sliced
    # off here.)  Consumers that can work feature-major could take out_t
    # directly and skip this transpose.
    return out_t[:, :B].T


def init_actor_params(key, flatten_size, node, action_dim):
    """torch.nn.Linear default init (uniform +-1/sqrt(fan_in)).

    Weights stored transposed ([out, in], like PyTorch) and cast to bf16 for
    the MXU; biases stay f32 and column-shaped for the feature-major layout.
    """
    k1, k2, k3, k4 = jax.random.split(key, 4)
    lim1 = 1.0 / jnp.sqrt(flatten_size)
    lim2 = 1.0 / jnp.sqrt(node)
    w1t = jax.random.uniform(k1, (node, flatten_size), jnp.float32, -lim1, lim1)
    b1 = jax.random.uniform(k2, (node, 1), jnp.float32, -lim1, lim1)
    w2t = jax.random.uniform(k3, (action_dim, node), jnp.float32, -lim2, lim2)
    b2 = jax.random.uniform(k4, (action_dim, 1), jnp.float32, -lim2, lim2)
    return w1t.astype(jnp.bfloat16), b1, w2t.astype(jnp.bfloat16), b2


if __name__ == "__main__":
    # Small shapes consistent with the module:
    #   state_size = [(8,), (8,)] -> two Identity preprocessors, flatten_size = 16
    #   node = 32 (hidden width), hidden_n = 1, action_size = (4,)
    B = 2
    state_dims = (8, 8)
    flatten_size = sum(state_dims)
    node = 32
    action_dim = 4

    key = jax.random.PRNGKey(0)
    kx1, kx2, kp = jax.random.split(key, 3)
    xs = [
        jax.random.normal(kx1, (B, state_dims[0]), jnp.float32),
        jax.random.normal(kx2, (B, state_dims[1]), jnp.float32),
    ]
    params = init_actor_params(kp, flatten_size, node, action_dim)

    action = actor_forward(xs, params)
    jax.block_until_ready(action)

    # Reference in plain JAX (f32 weights); kernel uses bf16 MXU inputs with
    # f32 accumulation, so use a loose tolerance.
    w1t, b1, w2t, b2 = params
    cated = jnp.concatenate(xs, axis=-1)
    h_ref = jnp.maximum(cated @ w1t.astype(jnp.float32).T + b1[:, 0], 0.0)
    ref = jnp.tanh(h_ref @ w2t.astype(jnp.float32).T + b2[:, 0])

    assert action.shape == (B, action_dim)
    assert bool(jnp.allclose(action, ref, atol=3e-2, rtol=3e-2))

    print("KERNEL_OK")
</pallas_src>

<mosaic_0001>
module attributes {stable_mosaic.version = 11 : i64} {
  func.func @_actor_kernel(%arg0: i32, %arg1: memref<16x128xbf16, #tpu.memory_space<vmem>>, %arg2: memref<32x16xbf16, #tpu.memory_space<vmem>>, %arg3: memref<32x1xf32, #tpu.memory_space<vmem>>, %arg4: memref<4x32xbf16, #tpu.memory_space<vmem>>, %arg5: memref<4x1xf32, #tpu.memory_space<vmem>>, %arg6: memref<4x128xf32, #tpu.memory_space<vmem>>) attributes {dimension_semantics = [#tpu.dimension_semantics<parallel>], iteration_bounds = array<i64: 1>, scalar_prefetch = 0 : i64, scratch_operands = 0 : i64, tpu.core_type = #tpu.core_type<tc>, window_params = [{transform_indices = @transform_0, window_bounds = array<i64: 16, 128>}, {pipeline_mode = #tpu.pipeline_mode<synchronous>, transform_indices = @transform_1, window_bounds = array<i64: 32, 16>}, {pipeline_mode = #tpu.pipeline_mode<synchronous>, transform_indices = @transform_2, window_bounds = array<i64: 32, 1>}, {pipeline_mode = #tpu.pipeline_mode<synchronous>, transform_indices = @transform_3, window_bounds = array<i64: 4, 32>}, {pipeline_mode = #tpu.pipeline_mode<synchronous>, transform_indices = @transform_4, window_bounds = array<i64: 4, 1>}, {transform_indices = @transform_5, window_bounds = array<i64: 4, 128>}]} {
    %c0 = arith.constant 0 : index
    %c0_0 = arith.constant 0 : index
    %0 = vector.load %arg2[%c0, %c0_0] : memref<32x16xbf16, #tpu.memory_space<vmem>>, vector<32x16xbf16>
    %c0_1 = arith.constant 0 : index
    %c0_2 = arith.constant 0 : index
    %1 = vector.load %arg1[%c0_1, %c0_2] : memref<16x128xbf16, #tpu.memory_space<vmem>>, vector<16x128xbf16>
    %cst = arith.constant dense<0.000000e+00> : vector<32x128xf32>
    %2 = tpu.matmul %0, %1, %cst {dimension_numbers = #tpu.dot_dimension_numbers<[1], [0], [0], [1], [0, 0, 1, 1], [], []>} : vector<32x16xbf16>, vector<16x128xbf16>, vector<32x128xf32> -> vector<32x128xf32>
    %c0_3 = arith.constant 0 : index
    %c0_4 = arith.constant 0 : index
    %3 = vector.load %arg3[%c0_3, %c0_4] : memref<32x1xf32, #tpu.memory_space<vmem>>, vector<32x1xf32>
    %4 = vector.broadcast %3 : vector<32x1xf32> to vector<32x128xf32>
    %5 = arith.addf %2, %4 : vector<32x128xf32>
    %cst_5 = arith.constant 0.000000e+00 : f32
    %6 = vector.broadcast %cst_5 : f32 to vector<32x128xf32>
    %7 = arith.maximumf %5, %6 : vector<32x128xf32>
    %c0_6 = arith.constant 0 : index
    %c0_7 = arith.constant 0 : index
    %8 = vector.load %arg4[%c0_6, %c0_7] : memref<4x32xbf16, #tpu.memory_space<vmem>>, vector<4x32xbf16>
    %9 = arith.truncf %7 : vector<32x128xf32> to vector<32x128xbf16>
    %cst_8 = arith.constant dense<0.000000e+00> : vector<4x128xf32>
    %10 = tpu.matmul %8, %9, %cst_8 {dimension_numbers = #tpu.dot_dimension_numbers<[1], [0], [0], [1], [0, 0, 1, 1], [], []>} : vector<4x32xbf16>, vector<32x128xbf16>, vector<4x128xf32> -> vector<4x128xf32>
    %c0_9 = arith.constant 0 : index
    %c0_10 = arith.constant 0 : index
    %11 = vector.load %arg5[%c0_9, %c0_10] : memref<4x1xf32, #tpu.memory_space<vmem>>, vector<4x1xf32>
    %12 = vector.broadcast %11 : vector<4x1xf32> to vector<4x128xf32>
    %13 = arith.addf %10, %12 : vector<4x128xf32>
    %14 = math.tanh %13 : vector<4x128xf32>
    %c0_11 = arith.constant 0 : index
    %c0_12 = arith.constant 0 : index
    %15 = vector.load %arg6[%c0_11, %c0_12] : memref<4x128xf32, #tpu.memory_space<vmem>>, vector<4x128xf32>
    tpu.vector_store %arg6[%c0_11, %c0_12], %14 {strides = array<i32>} : memref<4x128xf32, #tpu.memory_space<vmem>>, vector<4x128xf32>,
    return
  }
  func.func @transform_0(%arg0: i32) -> (i32, i32) {
    %c0_i32 = arith.constant 0 : i32
    %c0_i32_0 = arith.constant 0 : i32
    return %c0_i32, %arg0 : i32, i32
  }
  func.func @transform_1(%arg0: i32) -> (i32, i32) {
    %c0_i32 = arith.constant 0 : i32
    %c0_i32_0 = arith.constant 0 : i32
    %c0_i32_1 = arith.constant 0 : i32
    return %c0_i32, %c0_i32_0 : i32, i32
  }
  func.func @transform_2(%arg0: i32) -> (i32, i32) {
    %c0_i32 = arith.constant 0 : i32
    %c0_i32_0 = arith.constant 0 : i32
    %c0_i32_1 = arith.constant 0 : i32
    return %c0_i32, %c0_i32_0 : i32, i32
  }
  func.func @transform_3(%arg0: i32) -> (i32, i32) {
    %c0_i32 = arith.constant 0 : i32
    %c0_i32_0 = arith.constant 0 : i32
    %c0_i32_1 = arith.constant 0 : i32
    return %c0_i32, %c0_i32_0 : i32, i32
  }
  func.func @transform_4(%arg0: i32) -> (i32, i32) {
    %c0_i32 = arith.constant 0 : i32
    %c0_i32_0 = arith.constant 0 : i32
    %c0_i32_1 = arith.constant 0 : i32
    return %c0_i32, %c0_i32_0 : i32, i32
  }
  func.func @transform_5(%arg0: i32) -> (i32, i32) {
    %c0_i32 = arith.constant 0 : i32
    %c0_i32_0 = arith.constant 0 : i32
    return %c0_i32, %arg0 : i32, i32
  }
}

</mosaic_0001>

<llo_original>
// kernel: tpu_custom_call.1
$region0: #{tpu_custom_call.1}
  #allocation0 [shape = 'u32[]', space=smem, size = 0x4, offset = 0x4, fixed_abs, tag = 'smem constant byte address 0x4 - core index']
  #allocation1 [shape = 'u32[144,128]{1,0:T(1,128)}', space=vmem, size = 0x12000, scoped, tag = 'internal scratch']
  %s0 = inlined_call_operand.vmem [shape: bf16[16,128], index: 0, kind: input, shape index: {}]
  %s1 = inlined_call_operand.vmem [shape: bf16[32,16], index: 1, kind: input, shape index: {}]
  %s2 = inlined_call_operand.vmem [shape: f32[32,1], index: 2, kind: input, shape index: {}]
  %s3 = inlined_call_operand.vmem [shape: bf16[4,32], index: 3, kind: input, shape index: {}]
  %s4 = inlined_call_operand.vmem [shape: f32[4,1], index: 4, kind: input, shape index: {}]
  %s5 = inlined_call_operand.hbm [shape: f32[4,128], index: 5, kind: output, shape index: {}]
  %s6 = sld [smem:[#allocation0]]
  $region30: #{tpu_custom_call.1} parent=0
    _
  %s8 = ssub.s32 1, %s6
  %s9 = scalar_select 0, %s8, %s6
  $region1: #{tpu_custom_call.1} parent=0
    #allocation2 [shape = 'u8[2048]{0}', space=vmem, size = 0x800, scoped, tag = 'output window, operand 0, single buffered']
    #allocation3 [shape = 's32[1]{0}', space=sflag, size = 0x4, scoped, tag = 'scoped memory for tpu_custom_call.1']
    %10 = vsyncpa [#allocation3], 0
    // Predicated region
    $region2: #{tpu_custom_call.1} parent=1 // pred_check
      _
    $region3: #{tpu_custom_call.1} parent=1 // pred_check_branch
      %12 = sbr.rel (0) target = $region5
    $region4: #{tpu_custom_call.1} parent=1 // pred_region
      _
    $region5: #{tpu_custom_call.1} parent=1 // pred_fallthru
      _
    // Predicated region
    $region6: #{tpu_custom_call.1} parent=1 // pred_check
      _
    $region7: #{tpu_custom_call.1} parent=1 // pred_check_branch
      %14 = sbr.rel (0) target = $region9
    $region8: #{tpu_custom_call.1} parent=1 // pred_region
      _
    $region9: #{tpu_custom_call.1} parent=1 // pred_fallthru
      _
    // Predicated region
    $region10: #{tpu_custom_call.1} parent=1 // pred_check
      _
    $region11: #{tpu_custom_call.1} parent=1 // pred_check_branch
      %16 = sbr.rel (0) target = $region13
    $region12: #{tpu_custom_call.1} parent=1 // pred_region
      _
    $region13: #{tpu_custom_call.1} parent=1 // pred_fallthru
      _
    // Predicated region
    $region14: #{tpu_custom_call.1} parent=1 // pred_check
      _
    $region15: #{tpu_custom_call.1} parent=1 // pred_check_branch
      %18 = sbr.rel (0) target = $region17
    $region16: #{tpu_custom_call.1} parent=1 // pred_region
      _
    $region17: #{tpu_custom_call.1} parent=1 // pred_fallthru
      _
    // Predicated region
    $region18: #{tpu_custom_call.1} parent=1 // pred_check
      _
    $region19: #{tpu_custom_call.1} parent=1 // pred_check_branch
      %20 = sbr.rel (0) target = $region21
    $region20: #{tpu_custom_call.1} parent=1 // pred_region
      _
    $region21: #{tpu_custom_call.1} parent=1 // pred_fallthru
      _
    %v22 = vld [vmem:[%s1] sm:$0xf]
    %v23 = vld [vmem:[%s1 + $0x4] sm:$0xf]
    %v24 = vld [vmem:[%s1 + $0x8] sm:$0xf]
    %v25 = vld [vmem:[%s1 + $0xc] sm:$0xf]
    %v26 = vld [vmem:[%s0] sm:$0xf]
    %v27 = vld [vmem:[%s0 + $0x4] sm:$0xf]
    %v28 = vld [vmem:[%s2] sm:$0xff]
    %v29 = vld [vmem:[%s2 + $0x8] sm:$0xff]
    %v30 = vld [vmem:[%s2 + $0x10] sm:$0xff]
    %v31 = vld [vmem:[%s2 + $0x18] sm:$0xff]
    %33 = vset.pattern.permute.xlu0 0
    %34 = vperm.xlu0 %33, %v28
    %v35 = vpop.permute.xlu0 %34
    %38 = vset.pattern.permute.xlu0 0
    %39 = vperm.xlu0 %38, %v29
    %v40 = vpop.permute.xlu0 %39
    %43 = vset.pattern.permute.xlu0 0
    %44 = vperm.xlu0 %43, %v30
    %v45 = vpop.permute.xlu0 %44
    %48 = vset.pattern.permute.xlu0 0
    %49 = vperm.xlu0 %48, %v31
    %v50 = vpop.permute.xlu0 %49
    %v56 = vunpack.c.l.b16 %v22
    %v57 = vunpack.c.l.b16 %v23
    %v58 = vunpack.c.l.b16 %v24
    %v59 = vunpack.c.l.b16 %v25
    %v60 = vpack.c.b16 %v57, %v56
    %v61 = vpack.c.b16 %v59, %v58
    %v64 = vunpack.c.l.b16 %v26
    %v65 = vunpack.c.l.b16 %v27
    %v66 = vpack.c.b16 %v65, %v64
    %vm68 = vcmask 130048
    %v70 = vsel %vm68, %v60, 0
    %v73 = vsel %vm68, %v61, 0
    %75 = vmatprep.subr.bf16.mxu0 0
    %76 = vmatpush1.bf16.msra.mxu0 %v66
    %77 = vmatprep.subr.bf16.mxu0 0
    %78 = vmatpush1.bf16.msra.mxu0 0
    %79 = vmatprep.subr.bf16.mxu0 0
    %80 = vmatpush1.bf16.msra.mxu0 0
    %81 = vmatprep.subr.bf16.mxu0 0
    %82 = vmatpush1.bf16.msra.mxu0 0
    %83 = vmatprep.subr.bf16.mxu0 0
    %84 = vmatpush1.bf16.msra.mxu0 0
    %85 = vmatprep.subr.bf16.mxu0 0
    %86 = vmatpush1.bf16.msra.mxu0 0
    %87 = vmatprep.subr.bf16.mxu0 0
    %88 = vmatpush1.bf16.msra.mxu0 0
    %89 = vmatprep.subr.bf16.mxu0 0
    %90 = vmatpush1.bf16.msra.mxu0 0
    %91 = vmatprep.subr.bf16.mxu0 0
    %92 = vmatpush1.bf16.msra.mxu0 0
    %93 = vmatprep.subr.bf16.mxu0 0
    %94 = vmatpush1.bf16.msra.mxu0 0
    %95 = vmatprep.subr.bf16.mxu0 0
    %96 = vmatpush1.bf16.msra.mxu0 0
    %97 = vmatprep.subr.bf16.mxu0 0
    %98 = vmatpush1.bf16.msra.mxu0 0
    %99 = vmatprep.subr.bf16.mxu0 0
    %100 = vmatpush1.bf16.msra.mxu0 0
    %101 = vmatprep.subr.bf16.mxu0 0
    %102 = vmatpush1.bf16.msra.mxu0 0
    %103 = vmatprep.subr.bf16.mxu0 0
    %104 = vmatpush1.bf16.msra.mxu0 0
    %105 = vmatprep.subr.bf16.mxu0 0
    %106 = vmatpush1.bf16.msra.mxu0 0
    %107 = vmatprep.mubr.bf16.mxu0 0
    %108 = vmatmul.mubr.bf16.gmra.mrb[0].mxu0 %v70
    %v109 = vpop.f32.mrb[0].mxu0
    %v110 = vadd.f32 %v35, %v109
    %v111 = vpop.f32.mrb[0].mxu0
    %v112 = vpop.f32.mrb[0].mxu0
    %v113 = vadd.f32 %v40, %v112
    %v114 = vpop.f32.mrb[0].mxu0
    %115 = vmatprep.mubr.bf16.mxu0 0
    %116 = vmatmul.mubr.bf16.gmra.mrb[0].mxu0 %v73
    %v117 = vpop.f32.mrb[0].mxu0
    %v118 = vadd.f32 %v45, %v117
    %v119 = vpop.f32.mrb[0].mxu0
    %v120 = vpop.f32.mrb[0].mxu0
    %v121 = vadd.f32 %v50, %v120
    %v122 = vpop.f32.mrb[0].mxu0
    %123 = vdwg.mxu0
    %v124 = vmax.f32 %v110, 0.0
    %v125 = vmax.f32 %v113, 0.0
    %v126 = vmax.f32 %v118, 0.0
    %v127 = vmax.f32 %v121, 0.0
    %v128 = vld [vmem:[%s3] sm:$0x3]
    %v129 = vpack.c.bf16 %v125, %v124
    %v130 = vpack.c.bf16 %v127, %v126
    %v131 = vld [vmem:[%s4] sm:$0xf]
    %133 = vset.pattern.permute.xlu0 0
    %134 = vperm.xlu0 %133, %v131
    %v135 = vpop.permute.xlu0 %134
    %vm137 = vcmask 261120
    %v139 = vsel %vm137, %v128, 0
    %141 = vmatprep.subr.bf16.mxu0 0
    %142 = vmatpush1.bf16.msra.mxu0 %v129
    %143 = vmatprep.subr.bf16.mxu0 0
    %144 = vmatpush1.bf16.msra.mxu0 %v130
    %145 = vmatprep.subr.bf16.mxu0 0
    %146 = vmatpush1.bf16.msra.mxu0 0
    %147 = vmatprep.subr.bf16.mxu0 0
    %148 = vmatpush1.bf16.msra.mxu0 0
    %149 = vmatprep.subr.bf16.mxu0 0
    %150 = vmatpush1.bf16.msra.mxu0 0
    %151 = vmatprep.subr.bf16.mxu0 0
    %152 = vmatpush1.bf16.msra.mxu0 0
    %153 = vmatprep.subr.bf16.mxu0 0
    %154 = vmatpush1.bf16.msra.mxu0 0
    %155 = vmatprep.subr.bf16.mxu0 0
    %156 = vmatpush1.bf16.msra.mxu0 0
    %157 = vmatprep.subr.bf16.mxu0 0
    %158 = vmatpush1.bf16.msra.mxu0 0
    %159 = vmatprep.subr.bf16.mxu0 0
    %160 = vmatpush1.bf16.msra.mxu0 0
    %161 = vmatprep.subr.bf16.mxu0 0
    %162 = vmatpush1.bf16.msra.mxu0 0
    %163 = vmatprep.subr.bf16.mxu0 0
    %164 = vmatpush1.bf16.msra.mxu0 0
    %165 = vmatprep.subr.bf16.mxu0 0
    %166 = vmatpush1.bf16.msra.mxu0 0
    %167 = vmatprep.subr.bf16.mxu0 0
    %168 = vmatpush1.bf16.msra.mxu0 0
    %169 = vmatprep.subr.bf16.mxu0 0
    %170 = vmatpush1.bf16.msra.mxu0 0
    %171 = vmatprep.subr.bf16.mxu0 0
    %172 = vmatpush1.bf16.msra.mxu0 0
    %173 = vmatprep.mubr.bf16.mxu0 0
    %174 = vmatmul.mubr.bf16.gmra.mrb[0].mxu0 %v139
    %v175 = vpop.f32.mrb[0].mxu0
    %v176 = vadd.f32 %v135, %v175
    %v177 = vpop.f32.mrb[0].mxu0
    %v178 = vpop.f32.mrb[0].mxu0
    %v179 = vpop.f32.mrb[0].mxu0
    %180 = vdwg.mxu0
    %v181 = vtanh.pop %v176
    %182 = vst [vmem:[#allocation2] sm:$0xf] %v181
    // Predicated region
    $region22: #{tpu_custom_call.1} parent=1 // pred_check
      _
    $region23: #{tpu_custom_call.1} parent=1 // pred_check_branch
      %184 = sbr.rel (0) target = $region25
    $region24: #{tpu_custom_call.1} parent=1 // pred_region
      %s186 = ssub.s32 64, 64
      %187 = vsyncadd [#allocation3], %s186
      %s189 = sshll.u32 [#allocation2], 4
      %s190 = int_to_ptr.vmem [resolvable:$true] %s189
      %192 = dma.vmem_to_hbm [thread:$0]  %s190, 64, %s5, [#allocation3]
    $region25: #{tpu_custom_call.1} parent=1 // pred_fallthru
      _
    // Predicated region
    $region26: #{tpu_custom_call.1} parent=1 // pred_check
      _
    $region27: #{tpu_custom_call.1} parent=1 // pred_check_branch
      %194 = sbr.rel (0) target = $region29
    $region28: #{tpu_custom_call.1} parent=1 // pred_region
      %195 = dma.done [#allocation3], 64
    $region29: #{tpu_custom_call.1} parent=1 // pred_fallthru
      _
    %196 = vsyncpa [#allocation3], 1

</llo_original>
